<compile_context>
chip_gen: v6e
topology: v6e:2x2x1
jax: 0.10.0
libtpu: 0.0.40
codegen_flags: <defaults>
</compile_context>

<pallas_src>
import jax
import jax.numpy as jnp
from jax.experimental import pallas as pl
from jax.experimental.pallas import tpu as pltpu

_LANE = 128
_VMEM_BUDGET = 32 * 1024 * 1024  # conservative: fits v5e/v6e/v7x scoped VMEM


def linear_block_kernel(x_ref, w_ref, p_ref, o_ref):
    # x: (N, F_in_pad)  w: (F_in_pad, TN)  p: (3, TN) = [bias; gamma; beta]
    x = x_ref[...]
    w = w_ref[...]
    p = p_ref[...].astype(jnp.float32)
    b = p[0:1, :]
    gamma = p[1:2, :]
    beta = p[2:3, :]

    # Linear (MXU, f32 accumulate) + bias.
    y = jnp.dot(x, w, preferred_element_type=jnp.float32) + b

    # Activation: ReLU.
    y = jnp.maximum(y, 0.0)

    # BatchNorm1d (training mode, biased batch variance), single-pass stats.
    inv_n = 1.0 / y.shape[0]
    s1 = jnp.sum(y, axis=0, keepdims=True)          # (1, TN)
    s2 = jnp.sum(y * y, axis=0, keepdims=True)      # (1, TN)
    mean = s1 * inv_n
    var = jnp.maximum(s2 * inv_n - mean * mean, 0.0)  # guard tiny cancellation
    inv_std = jax.lax.rsqrt(var + 1e-5)               # EUP slot

    scale = inv_std * gamma                            # fold affine into scale
    o_ref[...] = ((y - mean) * scale + beta).astype(o_ref.dtype)


def _round_up(v, m):
    return ((v + m - 1) // m) * m


def linear_block(x, w_t, b, gamma, beta):
    """x: (N, F_in), w_t: (F_in, F_out), b/gamma/beta: (1, F_out)."""
    N, F_in = x.shape
    F_out = w_t.shape[1]
    itemsize = 4  # f32 working set

    # --- Pad contraction dim (lane-dense MXU K), zeros are inert. ---
    F_in_pad = _round_up(F_in, _LANE)
    if F_in_pad != F_in:
        x = jnp.pad(x, ((0, 0), (0, F_in_pad - F_in)))
        w_t = jnp.pad(w_t, ((0, F_in_pad - F_in), (0, 0)))

    # --- Pick feature tile TN (multiple of 128) against VMEM budget. ---
    def fits(tn):
        per_tile = 2 * (F_in_pad * tn + N * tn + 3 * tn)  # double-buffered W/out/params
        resident = 2 * N * F_in_pad                        # x block (replicated)
        return (per_tile + resident) * itemsize <= _VMEM_BUDGET

    tn = min(512, _round_up(F_out, _LANE))
    tn = _round_up(tn, _LANE)
    while tn > _LANE and not fits(tn):
        tn -= _LANE
    tn = max(tn, _LANE)

    # --- Pad F_out to a multiple of TN; padded cols are all-zero (no NaNs). ---
    F_out_pad = _round_up(F_out, tn)
    pad_f = F_out_pad - F_out
    if pad_f:
        w_t = jnp.pad(w_t, ((0, 0), (0, pad_f)))
        b = jnp.pad(b, ((0, 0), (0, pad_f)))
        gamma = jnp.pad(gamma, ((0, 0), (0, pad_f)))
        beta = jnp.pad(beta, ((0, 0), (0, pad_f)))

    # Pack the three per-feature vectors into one (3, F_out_pad) slab.
    params = jnp.concatenate([b, gamma, beta], axis=0)

    grid = (F_out_pad // tn,)
    out = pl.pallas_call(
        linear_block_kernel,
        out_shape=jax.ShapeDtypeStruct((N, F_out_pad), x.dtype),
        grid=grid,
        in_specs=[
            pl.BlockSpec((N, F_in_pad), lambda j: (0, 0)),   # x: replicated
            pl.BlockSpec((F_in_pad, tn), lambda j: (0, j)),  # W tile
            pl.BlockSpec((3, tn), lambda j: (0, j)),         # [b; gamma; beta]
        ],
        out_specs=pl.BlockSpec((N, tn), lambda j: (0, j)),
        compiler_params=pltpu.CompilerParams(
            dimension_semantics=("parallel",),
            vmem_limit_bytes=_VMEM_BUDGET,
        ),
    )(x, w_t, params)

    return out[:, :F_out] if pad_f else out


def reference(x, w_t, b, gamma, beta, eps=1e-5):
    y = x @ w_t + b
    y = jnp.maximum(y, 0.0)
    mean = jnp.mean(y, axis=0, keepdims=True)
    var = jnp.mean((y - mean) ** 2, axis=0, keepdims=True)
    return (y - mean) / jnp.sqrt(var + eps) * gamma + beta


if __name__ == "__main__":
    # Small shapes consistent with the module's forward: x is (batch, in_features).
    batch, in_features, out_features = 16, 32, 128

    key = jax.random.PRNGKey(0)
    kx, kw, kb = jax.random.split(key, 3)

    x = jax.random.normal(kx, (batch, in_features), dtype=jnp.float32)

    # nn.Linear-style uniform(-1/sqrt(in), 1/sqrt(in)) init; W stored (out, in).
    bound = 1.0 / (in_features ** 0.5)
    w = jax.random.uniform(kw, (out_features, in_features), jnp.float32, -bound, bound)
    b = jax.random.uniform(kb, (1, out_features), jnp.float32, -bound, bound)
    w_t = w.T  # (F_in, F_out) so the kernel computes x @ W^T

    # BatchNorm1d affine params (default init: gamma=1, beta=0).
    gamma = jnp.ones((1, out_features), jnp.float32)
    beta = jnp.zeros((1, out_features), jnp.float32)

    out = linear_block(x, w_t, b, gamma, beta)
    out = jax.block_until_ready(out)

    ref = reference(x, w_t, b, gamma, beta)
    assert out.shape == (batch, out_features)
    assert jnp.allclose(out, ref, atol=1e-4, rtol=1e-4), "mismatch vs reference"

    # TODO(synk): BatchNorm1d running_mean/running_var updates are not emitted;
    # only the normalized forward output (training-mode batch stats) is produced.
    print("KERNEL_OK")
</pallas_src>

<mosaic_0001>
module attributes {stable_mosaic.version = 11 : i64} {
  func.func @linear_block_kernel(%arg0: i32, %arg1: memref<16x128xf32, #tpu.memory_space<vmem>>, %arg2: memref<128x128xf32, #tpu.memory_space<vmem>>, %arg3: memref<3x128xf32, #tpu.memory_space<vmem>>, %arg4: memref<16x128xf32, #tpu.memory_space<vmem>>) attributes {dimension_semantics = [#tpu.dimension_semantics<parallel>], iteration_bounds = array<i64: 1>, scalar_prefetch = 0 : i64, scratch_operands = 0 : i64, tpu.core_type = #tpu.core_type<tc>, window_params = [{pipeline_mode = #tpu.pipeline_mode<synchronous>, transform_indices = @transform_0, window_bounds = array<i64: 16, 128>}, {transform_indices = @transform_1, window_bounds = array<i64: 128, 128>}, {transform_indices = @transform_2, window_bounds = array<i64: 3, 128>}, {transform_indices = @transform_3, window_bounds = array<i64: 16, 128>}]} {
    %c0 = arith.constant 0 : index
    %c0_0 = arith.constant 0 : index
    %0 = vector.load %arg1[%c0, %c0_0] : memref<16x128xf32, #tpu.memory_space<vmem>>, vector<16x128xf32>
    %c0_1 = arith.constant 0 : index
    %c0_2 = arith.constant 0 : index
    %1 = vector.load %arg2[%c0_1, %c0_2] : memref<128x128xf32, #tpu.memory_space<vmem>>, vector<128x128xf32>
    %c0_3 = arith.constant 0 : index
    %c0_4 = arith.constant 0 : index
    %2 = vector.load %arg3[%c0_3, %c0_4] : memref<3x128xf32, #tpu.memory_space<vmem>>, vector<3x128xf32>
    %3 = vector.extract_strided_slice %2 {offsets = [0, 0], sizes = [1, 128], strides = [1, 1]} : vector<3x128xf32> to vector<1x128xf32>
    %4 = vector.extract_strided_slice %2 {offsets = [1, 0], sizes = [1, 128], strides = [1, 1]} : vector<3x128xf32> to vector<1x128xf32>
    %5 = vector.extract_strided_slice %2 {offsets = [2, 0], sizes = [1, 128], strides = [1, 1]} : vector<3x128xf32> to vector<1x128xf32>
    %cst = arith.constant dense<0.000000e+00> : vector<16x128xf32>
    %6 = tpu.matmul %0, %1, %cst {dimension_numbers = #tpu.dot_dimension_numbers<[1], [0], [0], [1], [0, 0, 1, 1], [], []>} : vector<16x128xf32>, vector<128x128xf32>, vector<16x128xf32> -> vector<16x128xf32>
    %7 = vector.broadcast %3 : vector<1x128xf32> to vector<16x128xf32>
    %8 = arith.addf %6, %7 : vector<16x128xf32>
    %cst_5 = arith.constant 0.000000e+00 : f32
    %9 = vector.broadcast %cst_5 : f32 to vector<16x128xf32>
    %10 = arith.maximumf %8, %9 : vector<16x128xf32>
    %cst_6 = arith.constant dense<0.000000e+00> : vector<128xf32>
    %11 = vector.multi_reduction <add>, %10, %cst_6 [0] : vector<16x128xf32> to vector<128xf32>
    %12 = vector.shape_cast %11 : vector<128xf32> to vector<1x128xf32>
    %13 = arith.mulf %10, %10 : vector<16x128xf32>
    %cst_7 = arith.constant dense<0.000000e+00> : vector<128xf32>
    %14 = vector.multi_reduction <add>, %13, %cst_7 [0] : vector<16x128xf32> to vector<128xf32>
    %15 = vector.shape_cast %14 : vector<128xf32> to vector<1x128xf32>
    %cst_8 = arith.constant 6.250000e-02 : f32
    %16 = vector.broadcast %cst_8 : f32 to vector<1x128xf32>
    %17 = arith.mulf %12, %16 : vector<1x128xf32>
    %cst_9 = arith.constant 6.250000e-02 : f32
    %18 = vector.broadcast %cst_9 : f32 to vector<1x128xf32>
    %19 = arith.mulf %15, %18 : vector<1x128xf32>
    %20 = arith.mulf %17, %17 : vector<1x128xf32>
    %21 = arith.subf %19, %20 : vector<1x128xf32>
    %cst_10 = arith.constant 0.000000e+00 : f32
    %22 = vector.broadcast %cst_10 : f32 to vector<1x128xf32>
    %23 = arith.maximumf %21, %22 : vector<1x128xf32>
    %cst_11 = arith.constant 9.99999974E-6 : f32
    %24 = vector.broadcast %cst_11 : f32 to vector<1x128xf32>
    %25 = arith.addf %23, %24 : vector<1x128xf32>
    %26 = math.rsqrt %25 : vector<1x128xf32>
    %27 = arith.mulf %26, %4 : vector<1x128xf32>
    %28 = vector.broadcast %17 : vector<1x128xf32> to vector<16x128xf32>
    %29 = arith.subf %10, %28 : vector<16x128xf32>
    %30 = vector.broadcast %27 : vector<1x128xf32> to vector<16x128xf32>
    %31 = arith.mulf %29, %30 : vector<16x128xf32>
    %32 = vector.broadcast %5 : vector<1x128xf32> to vector<16x128xf32>
    %33 = arith.addf %31, %32 : vector<16x128xf32>
    %c0_12 = arith.constant 0 : index
    %c0_13 = arith.constant 0 : index
    %34 = vector.load %arg4[%c0_12, %c0_13] : memref<16x128xf32, #tpu.memory_space<vmem>>, vector<16x128xf32>
    tpu.vector_store %arg4[%c0_12, %c0_13], %33 {strides = array<i32>} : memref<16x128xf32, #tpu.memory_space<vmem>>, vector<16x128xf32>,
    return
  }
  func.func @transform_0(%arg0: i32) -> (i32, i32) {
    %c0_i32 = arith.constant 0 : i32
    %c0_i32_0 = arith.constant 0 : i32
    %c0_i32_1 = arith.constant 0 : i32
    return %c0_i32, %c0_i32_0 : i32, i32
  }
  func.func @transform_1(%arg0: i32) -> (i32, i32) {
    %c0_i32 = arith.constant 0 : i32
    %c0_i32_0 = arith.constant 0 : i32
    return %c0_i32, %arg0 : i32, i32
  }
  func.func @transform_2(%arg0: i32) -> (i32, i32) {
    %c0_i32 = arith.constant 0 : i32
    %c0_i32_0 = arith.constant 0 : i32
    return %c0_i32, %arg0 : i32, i32
  }
  func.func @transform_3(%arg0: i32) -> (i32, i32) {
    %c0_i32 = arith.constant 0 : i32
    %c0_i32_0 = arith.constant 0 : i32
    return %c0_i32, %arg0 : i32, i32
  }
}

</mosaic_0001>

<llo_original>
// kernel: tpu_custom_call.1
$region0: #{tpu_custom_call.1}
  #allocation0 [shape = 'u32[]', space=smem, size = 0x4, offset = 0x4, fixed_abs, tag = 'smem constant byte address 0x4 - core index']
  #allocation1 [shape = 'u32[144,128]{1,0:T(1,128)}', space=vmem, size = 0x12000, scoped, tag = 'internal scratch']
  %s0 = inlined_call_operand.hbm [shape: f32[16,128], index: 0, kind: input, shape index: {}]
  %s1 = inlined_call_operand.hbm [shape: f32[128,128], index: 1, kind: input, shape index: {}]
  %s2 = inlined_call_operand.hbm [shape: f32[3,128], index: 2, kind: input, shape index: {}]
  %s3 = inlined_call_operand.hbm [shape: f32[16,128], index: 3, kind: output, shape index: {}]
  %s4 = sld [smem:[#allocation0]]
  $region34: #{tpu_custom_call.1} parent=0
    _
  %s6 = ssub.s32 1, %s4
  %s7 = scalar_select 0, %s6, %s4
  $region1: #{tpu_custom_call.1} parent=0
    #allocation2 [shape = 'u8[8192]{0}', space=vmem, size = 0x2000, scoped, tag = 'input window, operand 0, single buffered']
    #allocation3 [shape = 's32[1]{0}', space=sflag, size = 0x4, scoped, tag = 'scoped memory for tpu_custom_call.1']
    #allocation4 [shape = 's32[1]{0}', space=sflag, size = 0x4, scoped, tag = 'scoped memory for tpu_custom_call.1']
    #allocation5 [shape = 'u8[65536]{0}', space=vmem, size = 0x10000, scoped, tag = 'input window, operand 1, single buffered']
    #allocation6 [shape = 's32[1]{0}', space=sflag, size = 0x4, scoped, tag = 'scoped memory for tpu_custom_call.1']
    #allocation7 [shape = 'u8[2048]{0}', space=vmem, size = 0x800, scoped, tag = 'input window, operand 2, single buffered']
    #allocation8 [shape = 'u8[8192]{0}', space=vmem, size = 0x2000, scoped, tag = 'output window, operand 0, single buffered']
    %8 = vsyncpa [#allocation3], 0
    %9 = vsyncpa [#allocation6], 0
    %10 = vsyncpa [#allocation4], 0
    // Predicated region
    $region2: #{tpu_custom_call.1} parent=1 // pred_check
      _
    $region3: #{tpu_custom_call.1} parent=1 // pred_check_branch
      %12 = sbr.rel (0) target = $region5
    $region4: #{tpu_custom_call.1} parent=1 // pred_region
      %s14 = ssub.s32 256, 256
      %15 = vsyncadd [#allocation3], %s14
      %s16 = sshll.u32 [#allocation2], 4
      %s17 = int_to_ptr.vmem [resolvable:$true] %s16
      %22 = dma.hbm_to_vmem [thread:$0]  %s0, 256, %s17, [#allocation3], 128, 128, 8
    $region5: #{tpu_custom_call.1} parent=1 // pred_fallthru
      _
    // Predicated region
    $region6: #{tpu_custom_call.1} parent=1 // pred_check
      _
    $region7: #{tpu_custom_call.1} parent=1 // pred_check_branch
      %24 = sbr.rel (0) target = $region9
    $region8: #{tpu_custom_call.1} parent=1 // pred_region
      %s26 = ssub.s32 2048, 2048
      %27 = vsyncadd [#allocation6], %s26
      %s28 = sshll.u32 [#allocation5], 4
      %s29 = int_to_ptr.vmem [resolvable:$true] %s28
      %34 = dma.hbm_to_vmem [thread:$0]  %s1, 2048, %s29, [#allocation6], 128, 128, 8
    $region9: #{tpu_custom_call.1} parent=1 // pred_fallthru
      _
    // Predicated region
    $region10: #{tpu_custom_call.1} parent=1 // pred_check
      _
    $region11: #{tpu_custom_call.1} parent=1 // pred_check_branch
      %36 = sbr.rel (0) target = $region13
    $region12: #{tpu_custom_call.1} parent=1 // pred_region
      %s38 = ssub.s32 64, 64
      %39 = vsyncadd [#allocation6], %s38
      %s41 = sshll.u32 [#allocation7], 4
      %s42 = int_to_ptr.vmem [resolvable:$true] %s41
      %44 = dma.hbm_to_vmem [thread:$0]  %s2, 64, %s42, [#allocation6]
    $region13: #{tpu_custom_call.1} parent=1 // pred_fallthru
      _
    // Predicated region
    $region14: #{tpu_custom_call.1} parent=1 // pred_check
      _
    $region15: #{tpu_custom_call.1} parent=1 // pred_check_branch
      %46 = sbr.rel (0) target = $region17
    $region16: #{tpu_custom_call.1} parent=1 // pred_region
      %47 = dma.done [#allocation3], 256
    $region17: #{tpu_custom_call.1} parent=1 // pred_fallthru
      _
    // Predicated region
    $region18: #{tpu_custom_call.1} parent=1 // pred_check
      _
    $region19: #{tpu_custom_call.1} parent=1 // pred_check_branch
      %49 = sbr.rel (0) target = $region21
    $region20: #{tpu_custom_call.1} parent=1 // pred_region
      %50 = dma.done [#allocation6], 2048
    $region21: #{tpu_custom_call.1} parent=1 // pred_fallthru
      _
    // Predicated region
    $region22: #{tpu_custom_call.1} parent=1 // pred_check
      _
    $region23: #{tpu_custom_call.1} parent=1 // pred_check_branch
      %52 = sbr.rel (0) target = $region25
    $region24: #{tpu_custom_call.1} parent=1 // pred_region
      %53 = dma.done [#allocation6], 64
    $region25: #{tpu_custom_call.1} parent=1 // pred_fallthru
      _
    %v54 = vld [vmem:[#allocation2] sm:$0xff]
    %v55 = vld [vmem:[#allocation2 + $0x8] sm:$0xff]
    %v56 = vld [vmem:[#allocation5] sm:$0xff]
    %v57 = vld [vmem:[#allocation5 + $0x8] sm:$0xff]
    %v58 = vld [vmem:[#allocation5 + $0x10] sm:$0xff]
    %v59 = vld [vmem:[#allocation5 + $0x18] sm:$0xff]
    %v60 = vld [vmem:[#allocation5 + $0x20] sm:$0xff]
    %v61 = vld [vmem:[#allocation5 + $0x28] sm:$0xff]
    %v62 = vld [vmem:[#allocation5 + $0x30] sm:$0xff]
    %v63 = vld [vmem:[#allocation5 + $0x38] sm:$0xff]
    %v64 = vld [vmem:[#allocation5 + $0x40] sm:$0xff]
    %v65 = vld [vmem:[#allocation5 + $0x48] sm:$0xff]
    %v66 = vld [vmem:[#allocation5 + $0x50] sm:$0xff]
    %v67 = vld [vmem:[#allocation5 + $0x58] sm:$0xff]
    %v68 = vld [vmem:[#allocation5 + $0x60] sm:$0xff]
    %v69 = vld [vmem:[#allocation5 + $0x68] sm:$0xff]
    %v70 = vld [vmem:[#allocation5 + $0x70] sm:$0xff]
    %v71 = vld [vmem:[#allocation5 + $0x78] sm:$0xff]
    %v72 = vld [vmem:[#allocation7] sm:$0x7]
    %v73 = vlaneseq
    %v74 = vshrl.u32 %v73, 7
    %v75 = vsub.s32 0, %v74
    %v76 = vrot.slane %v72, %v75
    %77 = vmatprep.subr.mxu0 0.0
    %78 = vmatpush1.msra.mxu0 %v71
    %79 = vmatprep.subr.mxu0 0.0
    %80 = vmatpush1.msra.mxu0 %v70
    %81 = vmatprep.subr.mxu0 0.0
    %82 = vmatpush1.msra.mxu0 %v69
    %83 = vmatprep.subr.mxu0 0.0
    %84 = vmatpush1.msra.mxu0 %v68
    %85 = vmatprep.subr.mxu0 0.0
    %86 = vmatpush1.msra.mxu0 %v67
    %87 = vmatprep.subr.mxu0 0.0
    %88 = vmatpush1.msra.mxu0 %v66
    %89 = vmatprep.subr.mxu0 0.0
    %90 = vmatpush1.msra.mxu0 %v65
    %91 = vmatprep.subr.mxu0 0.0
    %92 = vmatpush1.msra.mxu0 %v64
    %93 = vmatprep.subr.mxu0 0.0
    %94 = vmatpush1.msra.mxu0 %v63
    %95 = vmatprep.subr.mxu0 0.0
    %96 = vmatpush1.msra.mxu0 %v62
    %97 = vmatprep.subr.mxu0 0.0
    %98 = vmatpush1.msra.mxu0 %v61
    %99 = vmatprep.subr.mxu0 0.0
    %100 = vmatpush1.msra.mxu0 %v60
    %101 = vmatprep.subr.mxu0 0.0
    %102 = vmatpush1.msra.mxu0 %v59
    %103 = vmatprep.subr.mxu0 0.0
    %104 = vmatpush1.msra.mxu0 %v58
    %105 = vmatprep.subr.mxu0 0.0
    %106 = vmatpush1.msra.mxu0 %v57
    %107 = vmatprep.subr.mxu0 0.0
    %108 = vmatpush1.msra.mxu0 %v56
    %109 = vmatprep.subr.mxu0 0.0
    %110 = vmatpush2.msra.mxu0 0.0
    %111 = vmatprep.subr.mxu0 0.0
    %112 = vmatpush2.msra.mxu0 0.0
    %113 = vmatprep.subr.mxu0 0.0
    %114 = vmatpush2.msra.mxu0 0.0
    %115 = vmatprep.subr.mxu0 0.0
    %116 = vmatpush2.msra.mxu0 0.0
    %117 = vmatprep.subr.mxu0 0.0
    %118 = vmatpush2.msra.mxu0 0.0
    %119 = vmatprep.subr.mxu0 0.0
    %120 = vmatpush2.msra.mxu0 0.0
    %121 = vmatprep.subr.mxu0 0.0
    %122 = vmatpush2.msra.mxu0 0.0
    %123 = vmatprep.subr.mxu0 0.0
    %124 = vmatpush2.msra.mxu0 0.0
    %125 = vmatprep.subr.mxu0 0.0
    %126 = vmatpush2.msra.mxu0 0.0
    %127 = vmatprep.subr.mxu0 0.0
    %128 = vmatpush2.msra.mxu0 0.0
    %129 = vmatprep.subr.mxu0 0.0
    %130 = vmatpush2.msra.mxu0 0.0
    %131 = vmatprep.subr.mxu0 0.0
    %132 = vmatpush2.msra.mxu0 0.0
    %133 = vmatprep.subr.mxu0 0.0
    %134 = vmatpush2.msra.mxu0 0.0
    %135 = vmatprep.subr.mxu0 0.0
    %136 = vmatpush2.msra.mxu0 0.0
    %137 = vmatprep.subr.mxu0 0.0
    %138 = vmatpush2.msra.mxu0 0.0
    %139 = vmatprep.subr.mxu0 0.0
    %140 = vmatpush2.msra.mxu0 0.0
    %141 = vmatprep.mubr.f32.mxu0 0.0
    %142 = vmatmul.mubr.f32.gmra.mxu0 %v54
    %v143 = vpop.f32.mrf.mxu0
    %v144 = vadd.f32 %v76, %v143
    %v145 = vpop.f32.mrf.mxu0
    %146 = vmatprep.mubr.f32.mxu0 0.0
    %147 = vmatmul.mubr.f32.gmra.mxu0 %v55
    %v148 = vpop.f32.mrf.mxu0
    %v149 = vadd.f32 %v76, %v148
    %v150 = vpop.f32.mrf.mxu0
    %151 = vdwg.mxu0
    %v152 = vmax.f32 %v144, 0.0
    %v153 = vmax.f32 %v149, 0.0
    %v154 = vadd.f32 %v152, %v153
    %v155 = vrot.slane %v154, 4
    %v156 = vadd.f32 %v154, %v155
    %v157 = vrot.slane %v156, 2
    %v158 = vadd.f32 %v156, %v157
    %v159 = vrot.slane %v158, 1
    %v160 = vadd.f32 %v158, %v159
    %v161 = vmul.f32 %v152, %v152
    %v162 = vmul.f32 %v153, %v153
    %v163 = vadd.f32 %v161, %v162
    %v164 = vrot.slane %v163, 4
    %v165 = vadd.f32 %v163, %v164
    %v166 = vrot.slane %v165, 2
    %v167 = vadd.f32 %v165, %v166
    %v168 = vrot.slane %v167, 1
    %v169 = vadd.f32 %v167, %v168
    %v170 = vmul.f32 %v160, 0.0625
    %v171 = vmul.f32 %v169, 0.0625
    %v172 = vmul.f32 %v170, %v170
    %v173 = vsub.f32 %v171, %v172
    %v174 = vmax.f32 %v173, 0.0
    %v175 = vadd.f32 %v174, 1e-05
    %v176 = vrsqrt.pop %v175
    %v177 = vmul.f32 %v176, %v72
    %v178 = vsub.f32 %v152, %v170
    %v179 = vsub.f32 %v153, %v170
    %v180 = vlaneseq
    %v181 = vshrl.u32 %v180, 7
    %v182 = vsub.s32 1, %v181
    %v183 = vrot.slane %v177, %v182
    %v184 = vmul.f32 %v178, %v183
    %v185 = vmul.f32 %v179, %v183
    %v186 = vlaneseq
    %v187 = vshrl.u32 %v186, 7
    %v188 = vsub.s32 2, %v187
    %v189 = vrot.slane %v72, %v188
    %v190 = vadd.f32 %v184, %v189
    %v191 = vadd.f32 %v185, %v189
    %192 = vst [vmem:[#allocation8] sm:$0xff] %v190
    %193 = vst [vmem:[#allocation8 + $0x8] sm:$0xff] %v191
    // Predicated region
    $region26: #{tpu_custom_call.1} parent=1 // pred_check
      _
    $region27: #{tpu_custom_call.1} parent=1 // pred_check_branch
      %195 = sbr.rel (0) target = $region29
    $region28: #{tpu_custom_call.1} parent=1 // pred_region
      %s197 = ssub.s32 256, 256
      %198 = vsyncadd [#allocation4], %s197
      %s199 = sshll.u32 [#allocation8], 4
      %s200 = int_to_ptr.vmem [resolvable:$true] %s199
      %205 = dma.vmem_to_hbm [thread:$0]  %s200, 256, %s3, [#allocation4], 128, 128, 8
    $region29: #{tpu_custom_call.1} parent=1 // pred_fallthru
      _
    // Predicated region
    $region30: #{tpu_custom_call.1} parent=1 // pred_check
      _
    $region31: #{tpu_custom_call.1} parent=1 // pred_check_branch
      %207 = sbr.rel (0) target = $region33
    $region32: #{tpu_custom_call.1} parent=1 // pred_region
      %208 = dma.done [#allocation4], 256
    $region33: #{tpu_custom_call.1} parent=1 // pred_fallthru
      _
    %209 = vsyncpa [#allocation3], 1
    %210 = vsyncpa [#allocation6], 1
    %211 = vsyncpa [#allocation4], 1

</llo_original>
